<compile_context>
chip_gen: v7x
topology: tpu7x:2x2x1
jax: 0.10.0
libtpu: 0.0.40
codegen_flags: <defaults>
</compile_context>

<pallas_src>
import functools

import jax
import jax.numpy as jnp
from jax import lax
from jax.experimental import pallas as pl
from jax.experimental.pallas import tpu as pltpu

_MIB = 1024 * 1024


# ---------------------------------------------------------------------------
# Kernel body: pure VPU mul/add + two XLU lane rotations per tensor.
# ---------------------------------------------------------------------------
def _rope_kernel(cos_ref, sin_ref, q_ref, k_ref, q_out_ref, k_out_ref, *, half, hd):
    cos = cos_ref[...].astype(jnp.float32)      # (TS, H*D)
    sin_hi = sin_ref[...].astype(jnp.float32)   # zero outside [half, rope_dim) per head
    shift_m = (hd - half) % hd                  # roll by -half: lane i <- lane i+half

    def apply(x_ref, o_ref):
        x = x_ref[...].astype(jnp.float32)      # (TS, H*D)
        # out[i] = x[i]*cos[i] + x[i-half]*sin_hi[i] - x[i+half]*sin_hi[i+half]
        out = (x * cos
               + pltpu.roll(x, shift=half, axis=1) * sin_hi
               - pltpu.roll(x * sin_hi, shift=shift_m, axis=1))
        o_ref[...] = out.astype(o_ref.dtype)

    apply(q_ref, q_out_ref)
    apply(k_ref, k_out_ref)


# ---------------------------------------------------------------------------
# Generation-aware VMEM budget / limit.
# ---------------------------------------------------------------------------
def _vmem_budget_and_limit():
    try:
        cap = int(pltpu.get_tpu_info().vmem_capacity_bytes)
    except Exception:
        cap = None
    if cap is None:
        # Unknown chip: stay inside the universal 16 MiB default scoped VMEM.
        return 14 * _MIB, None
    # 128 MiB chips (v5e/v6e): limit 96 MiB, budget 48 MiB.
    # 64 MiB chips (v7x per-TC): limit 48 MiB, budget 24 MiB.
    limit = min((cap * 3) // 4, 96 * _MIB)
    return limit // 2, limit


def _row_multiple(itemsize):
    # Min efficient sublane tile: (8,128) f32, (16,128) bf16, (32,128) int8/fp8.
    return 8 * max(1, 4 // int(itemsize))


def _choose_seq_tile(S, HD, x_bytes, c_bytes, vmem_budget_bytes):
    """Largest seq tile (multiple of the dtype row-multiple) whose double-buffered
    working set (q, k, q_out, k_out + 2 caches) fits the VMEM budget."""
    row_mult = _row_multiple(x_bytes)
    per_row = 2 * HD * (4 * x_bytes + 2 * c_bytes)   # 2x for double buffering
    max_rows = max(row_mult, vmem_budget_bytes // max(per_row, 1))
    if S <= row_mult:
        return S                                     # full seq dim: always legal
    ts = min(S, max_rows)
    ts = max(row_mult, (ts // row_mult) * row_mult)
    return ts


class RotaryEmbedding:
    """JAX/Pallas port of the PyTorch RotaryEmbedding module (forward only)."""

    def __init__(self, block_size, base, rope_dim, dtype=jnp.float32):
        assert rope_dim % 2 == 0, "rope_dim must be even"
        self.block_size = block_size
        self.base = float(base)
        self.dim = rope_dim
        self.dtype = dtype
        # Deterministic buffer construction (matches the PyTorch __init__).
        inv_freq = 1.0 / (self.base ** (jnp.arange(0, rope_dim, 2, dtype=jnp.float32) / rope_dim))
        t = jnp.arange(block_size, dtype=jnp.float32)
        freqs = jnp.outer(t, inv_freq)                          # (block, rope_dim//2)
        emb = jnp.concatenate((freqs, freqs), axis=-1)          # (block, rope_dim)
        self.cos_cached = jnp.cos(emb).astype(self.dtype)       # stored as (block, rope_dim)
        self.sin_cached = jnp.sin(emb).astype(self.dtype)
        self._expanded = {}   # (H, D, dtype) -> lane-dense (block, H*D) caches

    def _expanded_caches(self, H, D, dtype):
        """Lane-dense per-head-tiled caches, stored in the q/k dtype.

        Per-head lane layout: rope lanes [0, rope_dim) then pass-through [rope_dim, D).
        cos_head has 1.0 on pass-through lanes; sin_hi_head is exactly zero on
        [0, half) and [rope_dim, D) — the kernel's roll identity depends on this.
        """
        key = (H, D, jnp.dtype(dtype).name)
        if key not in self._expanded:
            half = self.dim // 2
            pad = D - self.dim
            cos = self.cos_cached.astype(jnp.float32)           # (block, rope_dim)
            sin = self.sin_cached.astype(jnp.float32)
            ones_pad = jnp.ones((self.block_size, pad), jnp.float32)
            zeros_pad = jnp.zeros((self.block_size, pad), jnp.float32)
            zeros_lo = jnp.zeros((self.block_size, half), jnp.float32)
            cos_head = jnp.concatenate([cos, ones_pad], axis=-1)                       # (block, D)
            sin_hi_head = jnp.concatenate([zeros_lo, sin[:, half:], zeros_pad], axis=-1)
            tile = lambda a: jnp.tile(a, (1, H)).astype(dtype)                         # (block, H*D)
            self._expanded[key] = (tile(cos_head), tile(sin_hi_head))
        return self._expanded[key]

    def __call__(self, queries, keys, start_pos=0):
        assert queries.shape == keys.shape
        B, S, H, D = keys.shape
        assert D >= self.dim
        if isinstance(start_pos, int):
            # dynamic_slice silently clamps out-of-range starts; fail loudly instead.
            assert 0 <= start_pos and start_pos + S <= self.block_size
        HD = H * D
        half = self.dim // 2

        cos_full, sin_full = self._expanded_caches(H, D, queries.dtype)
        # TODO(synk): for a traced (decode-style) start_pos, fold the row offset into
        # the cache index_map via scalar prefetch instead of materializing sliced
        # cache slabs in HBM every call.
        cos = lax.dynamic_slice_in_dim(cos_full, start_pos, S, axis=0)     # (S, H*D)
        sin_hi = lax.dynamic_slice_in_dim(sin_full, start_pos, S, axis=0)

        q2 = queries.reshape(B, S, HD)   # lane-dense layout
        k2 = keys.reshape(B, S, HD)

        budget, vmem_limit = _vmem_budget_and_limit()
        ts = _choose_seq_tile(S, HD, q2.dtype.itemsize, cos.dtype.itemsize, budget)
        row_mult = _row_multiple(q2.dtype.itemsize)
        if B == 1 and S > row_mult and ts >= S:
            # Guarantee >=2 parallel grid steps (v7x dual TensorCore) by splitting
            # on the seq axis, which also preserves per-TC cache reuse.
            ts = max(row_mult, -(-((S + 1) // 2) // row_mult) * row_mult)
        T = pl.cdiv(S, ts)

        kernel = functools.partial(_rope_kernel, half=half, hd=HD)

        cache_spec = pl.BlockSpec((ts, HD), lambda t, b: (t, 0))
        qk_spec = pl.BlockSpec((None, ts, HD), lambda t, b: (b, t, 0))

        params = dict(dimension_semantics=("parallel", "parallel"))
        if vmem_limit is not None:
            params["vmem_limit_bytes"] = int(vmem_limit)

        q_out, k_out = pl.pallas_call(
            kernel,
            out_shape=(
                jax.ShapeDtypeStruct((B, S, HD), queries.dtype),
                jax.ShapeDtypeStruct((B, S, HD), keys.dtype),
            ),
            grid_spec=pltpu.PrefetchScalarGridSpec(
                num_scalar_prefetch=0,
                grid=(T, B),   # batch innermost: cos/sin blocks reused across batch
                in_specs=[cache_spec, cache_spec, qk_spec, qk_spec],
                out_specs=[qk_spec, qk_spec],
            ),
            compiler_params=pltpu.CompilerParams(**params),
        )(cos, sin_hi, q2, k2)

        return q_out.reshape(B, S, H, D), k_out.reshape(B, S, H, D)


def _reference(rope, queries, keys, start_pos=0):
    """Pure-JAX reference mirroring the PyTorch forward."""
    S = keys.shape[1]
    cos = rope.cos_cached[start_pos:start_pos + S][None, :, None, :]
    sin = rope.sin_cached[start_pos:start_pos + S][None, :, None, :]

    def rotate_half(x):
        h = x.shape[-1] // 2
        return jnp.concatenate((-x[..., h:], x[..., :h]), axis=-1)

    def apply(x):
        xr, xp = x[..., :rope.dim], x[..., rope.dim:]
        xr = xr * cos + rotate_half(xr) * sin
        return jnp.concatenate((xr, xp), axis=-1)

    return apply(queries), apply(keys)


if __name__ == "__main__":
    # Small config: block_size=16, base=10000, rope_dim=16, dtype=float32
    batch, seq, heads, head_dim = 2, 8, 4, 32
    rope = RotaryEmbedding(block_size=16, base=10000.0, rope_dim=16, dtype=jnp.float32)

    key = jax.random.PRNGKey(0)
    kq, kk = jax.random.split(key)
    queries = jax.random.normal(kq, (batch, seq, heads, head_dim), dtype=jnp.float32)
    keys = jax.random.normal(kk, (batch, seq, heads, head_dim), dtype=jnp.float32)

    # start_pos = 0
    q_out, k_out = rope(queries, keys, start_pos=0)
    jax.block_until_ready((q_out, k_out))
    q_ref, k_ref = _reference(rope, queries, keys, start_pos=0)
    assert jnp.allclose(q_out, q_ref, atol=1e-5, rtol=1e-5)
    assert jnp.allclose(k_out, k_ref, atol=1e-5, rtol=1e-5)

    # nonzero start_pos (decode-style offset)
    q_out2, k_out2 = rope(queries, keys, start_pos=5)
    jax.block_until_ready((q_out2, k_out2))
    q_ref2, k_ref2 = _reference(rope, queries, keys, start_pos=5)
    assert jnp.allclose(q_out2, q_ref2, atol=1e-5, rtol=1e-5)
    assert jnp.allclose(k_out2, k_ref2, atol=1e-5, rtol=1e-5)

    print("KERNEL_OK")
</pallas_src>

<mosaic_0001>
module attributes {stable_mosaic.version = 11 : i64} {
  func.func @_rope_kernel(%arg0: i32, %arg1: i32, %arg2: memref<8x128xf32, #tpu.memory_space<vmem>>, %arg3: memref<8x128xf32, #tpu.memory_space<vmem>>, %arg4: memref<1x8x128xf32, #tpu.memory_space<vmem>>, %arg5: memref<1x8x128xf32, #tpu.memory_space<vmem>>, %arg6: memref<1x8x128xf32, #tpu.memory_space<vmem>>, %arg7: memref<1x8x128xf32, #tpu.memory_space<vmem>>) attributes {dimension_semantics = [#tpu.dimension_semantics<parallel>, #tpu.dimension_semantics<parallel>], iteration_bounds = array<i64: 1, 2>, scalar_prefetch = 0 : i64, scratch_operands = 0 : i64, tpu.core_type = #tpu.core_type<tc>, window_params = [{transform_indices = @transform_0, window_bounds = array<i64: 8, 128>}, {transform_indices = @transform_1, window_bounds = array<i64: 8, 128>}, {transform_indices = @transform_2, window_bounds = array<i64: 1, 8, 128>}, {transform_indices = @transform_3, window_bounds = array<i64: 1, 8, 128>}, {transform_indices = @transform_4, window_bounds = array<i64: 1, 8, 128>}, {transform_indices = @transform_5, window_bounds = array<i64: 1, 8, 128>}]} {
    %c0 = arith.constant 0 : index
    %c0_0 = arith.constant 0 : index
    %0 = vector.load %arg2[%c0, %c0_0] : memref<8x128xf32, #tpu.memory_space<vmem>>, vector<8x128xf32>
    %c0_1 = arith.constant 0 : index
    %c0_2 = arith.constant 0 : index
    %1 = vector.load %arg3[%c0_1, %c0_2] : memref<8x128xf32, #tpu.memory_space<vmem>>, vector<8x128xf32>
    %c0_3 = arith.constant 0 : index
    %c0_4 = arith.constant 0 : index
    %c0_5 = arith.constant 0 : index
    %2 = vector.load %arg4[%c0_3, %c0_4, %c0_5] : memref<1x8x128xf32, #tpu.memory_space<vmem>>, vector<1x8x128xf32>
    %3 = vector.shape_cast %2 : vector<1x8x128xf32> to vector<8x128xf32>
    %4 = arith.mulf %3, %0 : vector<8x128xf32>
    %c8_i32 = arith.constant 8 : i32
    %5 = tpu.dynamic_rotate %3 by %c8_i32 dim 1 : vector<8x128xf32>, i32 -> vector<8x128xf32>
    %6 = arith.mulf %5, %1 : vector<8x128xf32>
    %7 = arith.addf %4, %6 : vector<8x128xf32>
    %8 = arith.mulf %3, %1 : vector<8x128xf32>
    %c120_i32 = arith.constant 120 : i32
    %9 = tpu.dynamic_rotate %8 by %c120_i32 dim 1 : vector<8x128xf32>, i32 -> vector<8x128xf32>
    %10 = arith.subf %7, %9 : vector<8x128xf32>
    %c0_6 = arith.constant 0 : index
    %c0_7 = arith.constant 0 : index
    %c0_8 = arith.constant 0 : index
    %11 = vector.load %arg6[%c0_6, %c0_7, %c0_8] : memref<1x8x128xf32, #tpu.memory_space<vmem>>, vector<1x8x128xf32>
    %12 = vector.shape_cast %11 : vector<1x8x128xf32> to vector<8x128xf32>
    %13 = vector.shape_cast %10 : vector<8x128xf32> to vector<1x8x128xf32>
    tpu.vector_store %arg6[%c0_6, %c0_7, %c0_8], %13 {strides = array<i32>} : memref<1x8x128xf32, #tpu.memory_space<vmem>>, vector<1x8x128xf32>,
    %c0_9 = arith.constant 0 : index
    %c0_10 = arith.constant 0 : index
    %c0_11 = arith.constant 0 : index
    %14 = vector.load %arg5[%c0_9, %c0_10, %c0_11] : memref<1x8x128xf32, #tpu.memory_space<vmem>>, vector<1x8x128xf32>
    %15 = vector.shape_cast %14 : vector<1x8x128xf32> to vector<8x128xf32>
    %16 = arith.mulf %15, %0 : vector<8x128xf32>
    %c8_i32_12 = arith.constant 8 : i32
    %17 = tpu.dynamic_rotate %15 by %c8_i32_12 dim 1 : vector<8x128xf32>, i32 -> vector<8x128xf32>
    %18 = arith.mulf %17, %1 : vector<8x128xf32>
    %19 = arith.addf %16, %18 : vector<8x128xf32>
    %20 = arith.mulf %15, %1 : vector<8x128xf32>
    %c120_i32_13 = arith.constant 120 : i32
    %21 = tpu.dynamic_rotate %20 by %c120_i32_13 dim 1 : vector<8x128xf32>, i32 -> vector<8x128xf32>
    %22 = arith.subf %19, %21 : vector<8x128xf32>
    %c0_14 = arith.constant 0 : index
    %c0_15 = arith.constant 0 : index
    %c0_16 = arith.constant 0 : index
    %23 = vector.load %arg7[%c0_14, %c0_15, %c0_16] : memref<1x8x128xf32, #tpu.memory_space<vmem>>, vector<1x8x128xf32>
    %24 = vector.shape_cast %23 : vector<1x8x128xf32> to vector<8x128xf32>
    %25 = vector.shape_cast %22 : vector<8x128xf32> to vector<1x8x128xf32>
    tpu.vector_store %arg7[%c0_14, %c0_15, %c0_16], %25 {strides = array<i32>} : memref<1x8x128xf32, #tpu.memory_space<vmem>>, vector<1x8x128xf32>,
    return
  }
  func.func @transform_0(%arg0: i32, %arg1: i32) -> (i32, i32) {
    %c0_i32 = arith.constant 0 : i32
    %c0_i32_0 = arith.constant 0 : i32
    return %arg0, %c0_i32 : i32, i32
  }
  func.func @transform_1(%arg0: i32, %arg1: i32) -> (i32, i32) {
    %c0_i32 = arith.constant 0 : i32
    %c0_i32_0 = arith.constant 0 : i32
    return %arg0, %c0_i32 : i32, i32
  }
  func.func @transform_2(%arg0: i32, %arg1: i32) -> (i32, i32, i32) {
    %c0_i32 = arith.constant 0 : i32
    %c0_i32_0 = arith.constant 0 : i32
    return %arg1, %arg0, %c0_i32 : i32, i32, i32
  }
  func.func @transform_3(%arg0: i32, %arg1: i32) -> (i32, i32, i32) {
    %c0_i32 = arith.constant 0 : i32
    %c0_i32_0 = arith.constant 0 : i32
    return %arg1, %arg0, %c0_i32 : i32, i32, i32
  }
  func.func @transform_4(%arg0: i32, %arg1: i32) -> (i32, i32, i32) {
    %c0_i32 = arith.constant 0 : i32
    %c0_i32_0 = arith.constant 0 : i32
    return %arg1, %arg0, %c0_i32 : i32, i32, i32
  }
  func.func @transform_5(%arg0: i32, %arg1: i32) -> (i32, i32, i32) {
    %c0_i32 = arith.constant 0 : i32
    %c0_i32_0 = arith.constant 0 : i32
    return %arg1, %arg0, %c0_i32 : i32, i32, i32
  }
}

</mosaic_0001>

<llo_original>
// kernel: tpu_custom_call.1
$region0: #{tpu_custom_call.1}
  #allocation0 [shape = 'u32[]', space=smem, size = 0x4, offset = 0x4, fixed_abs, tag = 'smem constant byte address 0x4 - core index']
  #allocation1 [shape = 'u32[144,128]{1,0:T(1,128)}', space=vmem, size = 0x12000, scoped, tag = 'internal scratch']
  %s0 = inlined_call_operand.hbm [shape: f32[8,128], index: 0, kind: input, shape index: {}]
  %s1 = inlined_call_operand.hbm [shape: f32[8,128], index: 1, kind: input, shape index: {}]
  %s2 = inlined_call_operand.hbm [shape: f32[2,8,128], index: 2, kind: input, shape index: {}]
  %s3 = inlined_call_operand.hbm [shape: f32[2,8,128], index: 3, kind: input, shape index: {}]
  %s4 = inlined_call_operand.hbm [shape: f32[2,8,128], index: 4, kind: output, shape index: {0}]
  %s5 = inlined_call_operand.hbm [shape: f32[2,8,128], index: 5, kind: output, shape index: {1}]
  %6 = xla_tuple %s4, %s5
  %s7 = sld [smem:[#allocation0]]
  $region73: #{tpu_custom_call.1} parent=0
    _
  %s9 = ssub.s32 1, %s7
  %s10 = scalar_select 0, %s9, %s7
  $region1: #{tpu_custom_call.1} parent=0
    #allocation2 [shape = 'u8[4096]{0}', space=vmem, size = 0x1000, scoped, tag = 'input window, operand 0, single buffered']
    #allocation3 [shape = 's32[2]{0}', space=sflag, size = 0x8, scoped, tag = 'scoped memory for tpu_custom_call.1']
    #allocation4 [shape = 's32[2]{0}', space=sflag, size = 0x8, scoped, tag = 'scoped memory for tpu_custom_call.1']
    #allocation5 [shape = 'u8[4096]{0}', space=vmem, size = 0x1000, scoped, tag = 'input window, operand 1, single buffered']
    #allocation6 [shape = 's32[1]{0}', space=sflag, size = 0x4, scoped, tag = 'scoped memory for tpu_custom_call.1']
    #allocation7 [shape = 'u8[8192]{0}', space=vmem, size = 0x2000, scoped, tag = 'input window, operand 2']
    #allocation8 [shape = 'u8[8192]{0}', space=vmem, size = 0x2000, scoped, tag = 'input window, operand 3']
    #allocation9 [shape = 'u8[8192]{0}', space=vmem, size = 0x2000, scoped, tag = 'output window, operand 0']
    #allocation10 [shape = 'u8[8192]{0}', space=vmem, size = 0x2000, scoped, tag = 'output window, operand 1']
    #allocation11 [shape = 's32[2]{0}', space=sflag, size = 0x8, scoped, tag = 'scoped memory for tpu_custom_call.1']
    %11 = vsyncpa [#allocation3], 0
    %12 = vsyncpa [#allocation6], 0
    %13 = vsyncpa [#allocation4], 0
    %s14 = scalar_lea.sflag [#allocation4], 1
    %15 = vsyncpa %s14, 0
    %16 = vsyncpa [#allocation11], 0
    %s17 = scalar_lea.sflag [#allocation11], 1
    %18 = vsyncpa %s17, 0
    loop: start=0, step=1, limit=4
    $region2: #{tpu_custom_call.1} parent=1 // loop_pre_header
      _
    $region3: #{tpu_custom_call.1} parent=1 // loop_header
      %s20 = sphi 0, %s24
      %p21 = scmp.ge.s32.totalorder %s20, 4
      %s27 = sphi 0, %s39
      %s28 = sphi 0, %s35
      %s29 = sphi 0, %s27
      %s30 = sphi 0, %s28
      %s31 = sphi 0, %s29
      %s32 = sphi 0, %s30
      %s42 = sphi 0, %s44
      %s45 = sphi 0, %s42
      %s46 = sphi 0, %s45
      %s62 = sphi 0, %s46
      %s68 = sphi 0, %s70
      %s71 = sphi 0, %s68
      %s72 = sphi 0, %s71
      %s88 = sphi 0, %s72
      %s96 = sphi 0, %s98
      %s99 = sphi 0, %s96
      %s100 = sphi 0, %s99
      %s116 = sphi 0, %s100
      %s124 = sphi 0, %s126
      %s127 = sphi 0, %s124
      %s128 = sphi 0, %s127
      %s144 = sphi 0, %s128
      %s152 = sphi 0, %s154
      %s155 = sphi 0, %s152
      %s156 = sphi 0, %s155
      %s172 = sphi 0, %s156
      %s180 = sphi 0, %s182
      %s183 = sphi 0, %s180
      %s184 = sphi 0, %s183
      %s200 = sphi 0, %s184
    $region4: #{tpu_custom_call.1} parent=1 // loop_header_branch
      %23 = sbr.rel (%p21) target = $region8
    $region5: #{tpu_custom_call.1} parent=1 // loop_body
      %s25 = ssub.s32 %s20, 1
      %s26 = ssub.s32 %s20, 2
      %s33 = sadd.s32 1, %s28
      %p34 = scmp.ge.s32.totalorder %s33, 2
      %s35 = scalar_select %p34, 0, %s33
      %s36 = sadd.s32 1, %s27
      %s37 = scalar_select %p34, %s36, %s27
      %p38 = scmp.ge.s32.totalorder %s37, 1
      %s39 = scalar_select %p38, 0, %s37
      %s40 = ssub.s32 %s27, %s39
      %p41 = scmp.eq.s32.totalorder %s40, 0
      %s43 = sadd.s32 %s42, 1
      %s44 = scalar_select %p41, %s42, %s43
      %p47 = pneg %p41
      %p48 = scmp.eq.s32.totalorder %s20, 1
      %p49 = por %p47, %p48
      %p50 = scmp.ne.s32.totalorder %s42, %s45
      %p51 = scmp.eq.s32.totalorder %s20, 0
      %p52 = por %p50, %p51
      %p53 = scmp.ne.s32.totalorder %s42, %s45
      %p54 = scmp.eq.s32.totalorder %s25, 1
      %p55 = por %p53, %p54
      %p56 = scmp.ne.s32.totalorder %s45, %s46
      %p57 = scmp.eq.s32.totalorder %s25, 0
      %p58 = por %p56, %p57
      %p59 = scmp.ne.s32.totalorder %s45, %s46
      %p60 = scmp.eq.s32.totalorder %s26, 1
      %p61 = por %p59, %p60
      %p63 = scmp.ne.s32.totalorder %s46, %s62
      %p64 = scmp.eq.s32.totalorder %s26, 0
      %p65 = por %p63, %p64
      %s66 = ssub.s32 %s27, %s39
      %p67 = scmp.eq.s32.totalorder %s66, 0
      %s69 = sadd.s32 %s68, 1
      %s70 = scalar_select %p67, %s68, %s69
      %p73 = pneg %p67
      %p74 = scmp.eq.s32.totalorder %s20, 1
      %p75 = por %p73, %p74
      %p76 = scmp.ne.s32.totalorder %s68, %s71
      %p77 = scmp.eq.s32.totalorder %s20, 0
      %p78 = por %p76, %p77
      %p79 = scmp.ne.s32.totalorder %s68, %s71
      %p80 = scmp.eq.s32.totalorder %s25, 1
      %p81 = por %p79, %p80
      %p82 = scmp.ne.s32.totalorder %s71, %s72
      %p83 = scmp.eq.s32.totalorder %s25, 0
      %p84 = por %p82, %p83
      %p85 = scmp.ne.s32.totalorder %s71, %s72
      %p86 = scmp.eq.s32.totalorder %s26, 1
      %p87 = por %p85, %p86
      %p89 = scmp.ne.s32.totalorder %s72, %s88
      %p90 = scmp.eq.s32.totalorder %s26, 0
      %p91 = por %p89, %p90
      %s92 = ssub.s32 %s28, %s35
      %s93 = ssub.s32 %s27, %s39
      %s94 = sor.u32 %s92, %s93
      %p95 = scmp.eq.s32.totalorder %s94, 0
      %s97 = sadd.s32 %s96, 1
      %s98 = scalar_select %p95, %s96, %s97
      %p101 = pneg %p95
      %p102 = scmp.eq.s32.totalorder %s20, 1
      %p103 = por %p101, %p102
      %p104 = scmp.ne.s32.totalorder %s96, %s99
      %p105 = scmp.eq.s32.totalorder %s20, 0
      %p106 = por %p104, %p105
      %p107 = scmp.ne.s32.totalorder %s96, %s99
      %p108 = scmp.eq.s32.totalorder %s25, 1
      %p109 = por %p107, %p108
      %p110 = scmp.ne.s32.totalorder %s99, %s100
      %p111 = scmp.eq.s32.totalorder %s25, 0
      %p112 = por %p110, %p111
      %p113 = scmp.ne.s32.totalorder %s99, %s100
      %p114 = scmp.eq.s32.totalorder %s26, 1
      %p115 = por %p113, %p114
      %p117 = scmp.ne.s32.totalorder %s100, %s116
      %p118 = scmp.eq.s32.totalorder %s26, 0
      %p119 = por %p117, %p118
      %s120 = ssub.s32 %s28, %s35
      %s121 = ssub.s32 %s27, %s39
      %s122 = sor.u32 %s120, %s121
      %p123 = scmp.eq.s32.totalorder %s122, 0
      %s125 = sadd.s32 %s124, 1
      %s126 = scalar_select %p123, %s124, %s125
      %p129 = pneg %p123
      %p130 = scmp.eq.s32.totalorder %s20, 1
      %p131 = por %p129, %p130
      %p132 = scmp.ne.s32.totalorder %s124, %s127
      %p133 = scmp.eq.s32.totalorder %s20, 0
      %p134 = por %p132, %p133
      %p135 = scmp.ne.s32.totalorder %s124, %s127
      %p136 = scmp.eq.s32.totalorder %s25, 1
      %p137 = por %p135, %p136
      %p138 = scmp.ne.s32.totalorder %s127, %s128
      %p139 = scmp.eq.s32.totalorder %s25, 0
      %p140 = por %p138, %p139
      %p141 = scmp.ne.s32.totalorder %s127, %s128
      %p142 = scmp.eq.s32.totalorder %s26, 1
      %p143 = por %p141, %p142
      %p145 = scmp.ne.s32.totalorder %s128, %s144
      %p146 = scmp.eq.s32.totalorder %s26, 0
      %p147 = por %p145, %p146
      %s148 = ssub.s32 %s28, %s35
      %s149 = ssub.s32 %s27, %s39
      %s150 = sor.u32 %s148, %s149
      %p151 = scmp.eq.s32.totalorder %s150, 0
      %s153 = sadd.s32 %s152, 1
      %s154 = scalar_select %p151, %s152, %s153
      %p157 = pneg %p151
      %p158 = scmp.eq.s32.totalorder %s20, 1
      %p159 = por %p157, %p158
      %p160 = scmp.ne.s32.totalorder %s152, %s155
      %p161 = scmp.eq.s32.totalorder %s20, 0
      %p162 = por %p160, %p161
      %p163 = scmp.ne.s32.totalorder %s152, %s155
      %p164 = scmp.eq.s32.totalorder %s25, 1
      %p165 = por %p163, %p164
      %p166 = scmp.ne.s32.totalorder %s155, %s156
      %p167 = scmp.eq.s32.totalorder %s25, 0
      %p168 = por %p166, %p167
      %p169 = scmp.ne.s32.totalorder %s155, %s156
      %p170 = scmp.eq.s32.totalorder %s26, 1
      %p171 = por %p169, %p170
      %p173 = scmp.ne.s32.totalorder %s156, %s172
      %p174 = scmp.eq.s32.totalorder %s26, 0
      %p175 = por %p173, %p174
      %s176 = ssub.s32 %s28, %s35
      %s177 = ssub.s32 %s27, %s39
      %s178 = sor.u32 %s176, %s177
      %p179 = scmp.eq.s32.totalorder %s178, 0
      %s181 = sadd.s32 %s180, 1
      %s182 = scalar_select %p179, %s180, %s181
      %p185 = pneg %p179
      %p186 = scmp.eq.s32.totalorder %s20, 1
      %p187 = por %p185, %p186
      %p188 = scmp.ne.s32.totalorder %s180, %s183
      %p189 = scmp.eq.s32.totalorder %s20, 0
      %p190 = por %p188, %p189
      %p191 = scmp.ne.s32.totalorder %s180, %s183
      %p192 = scmp.eq.s32.totalorder %s25, 1
      %p193 = por %p191, %p192
      %p194 = scmp.ne.s32.totalorder %s183, %s184
      %p195 = scmp.eq.s32.totalorder %s25, 0
      %p196 = por %p194, %p195
      %p197 = scmp.ne.s32.totalorder %s183, %s184
      %p198 = scmp.eq.s32.totalorder %s26, 1
      %p199 = por %p197, %p198
      %p201 = scmp.ne.s32.totalorder %s184, %s200
      %p202 = scmp.eq.s32.totalorder %s26, 0
      %p203 = por %p201, %p202
      %p204 = scmp.le.s32.totalorder 1, %s20
      %p205 = scmp.lt.s32.totalorder %s20, 3
      %p206 = pnand %p204, %p205
      %p207 = pneg %p206
      // Predicated region
      $region9: #{tpu_custom_call.1} parent=5 // pred_check
        _
      $region10: #{tpu_custom_call.1} parent=5 // pred_check_branch
        %209 = sbr.rel (%p206) target = $region12
      $region11: #{tpu_custom_call.1} parent=5 // pred_region
        %s210 = ssub.s32 %s20, 1
        // Predicated region
        $region13: #{tpu_custom_call.1} parent=11 // pred_check
          %p211 = pneg %p58
        $region14: #{tpu_custom_call.1} parent=11 // pred_check_branch
          %213 = sbr.rel (%p211) target = $region16
        $region15: #{tpu_custom_call.1} parent=11 // pred_region
          %s215 = ssub.s32 128, 128
          %216 = vsyncadd [#allocation3], %s215
          %s217 = smul.addr %s29, 128
          %s218 = scalar_lea.hbm %s0, %s217
          %s220 = sshll.u32 [#allocation2], 4
          %s221 = int_to_ptr.vmem [resolvable:$true] %s220
          %223 = dma.hbm_to_vmem [thread:$0]  %s218, 128, %s221, [#allocation3]
        $region16: #{tpu_custom_call.1} parent=11 // pred_fallthru
          _
        // Predicated region
        $region17: #{tpu_custom_call.1} parent=11 // pred_check
          %p224 = pneg %p84
        $region18: #{tpu_custom_call.1} parent=11 // pred_check_branch
          %226 = sbr.rel (%p224) target = $region20
        $region19: #{tpu_custom_call.1} parent=11 // pred_region
          %s228 = ssub.s32 128, 128
          %229 = vsyncadd [#allocation6], %s228
          %s230 = smul.addr %s29, 128
          %s231 = scalar_lea.hbm %s1, %s230
          %s233 = sshll.u32 [#allocation5], 4
          %s234 = int_to_ptr.vmem [resolvable:$true] %s233
          %236 = dma.hbm_to_vmem [thread:$0]  %s231, 128, %s234, [#allocation6]
        $region20: #{tpu_custom_call.1} parent=11 // pred_fallthru
          _
      $region12: #{tpu_custom_call.1} parent=5 // pred_fallthru
        _
      %p237 = scmp.lt.s32.totalorder %s20, 2
      // Predicated region
      $region21: #{tpu_custom_call.1} parent=5 // pred_check
        %p238 = pneg %p237
      $region22: #{tpu_custom_call.1} parent=5 // pred_check_branch
        %240 = sbr.rel (%p238) target = $region24
      $region23: #{tpu_custom_call.1} parent=5 // pred_region
        // Predicated region
        $region25: #{tpu_custom_call.1} parent=23 // pred_check
          %p241 = pneg %p106
        $region26: #{tpu_custom_call.1} parent=23 // pred_check_branch
          %243 = sbr.rel (%p241) target = $region28
        $region27: #{tpu_custom_call.1} parent=23 // pred_region
          %s244 = sand.u32 %s20, 1
          %s245 = scalar_lea.sflag [#allocation3], %s244
          %s246 = sand.u32 %s96, 1
          %s247 = smul.addr %s246, 8
          %s248 = scalar_lea.vmem [#allocation7], %s247
          %s250 = ssub.s32 128, 128
          %251 = vsyncadd %s245, %s250
          %s252 = sadd.s32 %s27, %s28
          %s253 = smul.addr %s252, 128
          %s254 = scalar_lea.hbm %s2, %s253
          %s256 = sshll.u32 %s248, 4
          %s257 = int_to_ptr.vmem [resolvable:$true] %s256
          %259 = dma.hbm_to_vmem [thread:$0]  %s254, 128, %s257, %s245
        $region28: #{tpu_custom_call.1} parent=23 // pred_fallthru
          _
        // Predicated region
        $region29: #{tpu_custom_call.1} parent=23 // pred_check
          %p260 = pneg %p134
        $region30: #{tpu_custom_call.1} parent=23 // pred_check_branch
          %262 = sbr.rel (%p260) target = $region32
        $region31: #{tpu_custom_call.1} parent=23 // pred_region
          %s263 = sand.u32 %s20, 1
          %s264 = scalar_lea.sflag [#allocation3], %s263
          %s265 = sand.u32 %s124, 1
          %s266 = smul.addr %s265, 8
          %s267 = scalar_lea.vmem [#allocation8], %s266
          %s269 = ssub.s32 128, 128
          %270 = vsyncadd %s264, %s269
          %s271 = sadd.s32 %s27, %s28
          %s272 = smul.addr %s271, 128
          %s273 = scalar_lea.hbm %s3, %s272
          %s275 = sshll.u32 %s267, 4
          %s276 = int_to_ptr.vmem [resolvable:$true] %s275
          %278 = dma.hbm_to_vmem [thread:$0]  %s273, 128, %s276, %s264
        $region32: #{tpu_custom_call.1} parent=23 // pred_fallthru
          _
      $region24: #{tpu_custom_call.1} parent=5 // pred_fallthru
        _
      %p279 = scmp.le.s32.totalorder 1, %s20
      %p280 = scmp.lt.s32.totalorder %s20, 3
      %p281 = pnand %p279, %p280
      %p282 = pneg %p281
      // Predicated region
      $region33: #{tpu_custom_call.1} parent=5 // pred_check
        _
      $region34: #{tpu_custom_call.1} parent=5 // pred_check_branch
        %284 = sbr.rel (%p281) target = $region36
      $region35: #{tpu_custom_call.1} parent=5 // pred_region
        %s285 = ssub.s32 %s20, 1
        // Predicated region
        $region37: #{tpu_custom_call.1} parent=35 // pred_check
          %p286 = pneg %p58
        $region38: #{tpu_custom_call.1} parent=35 // pred_check_branch
          %288 = sbr.rel (%p286) target = $region40
        $region39: #{tpu_custom_call.1} parent=35 // pred_region
          %289 = dma.done [#allocation3], 128
        $region40: #{tpu_custom_call.1} parent=35 // pred_fallthru
          _
        // Predicated region
        $region41: #{tpu_custom_call.1} parent=35 // pred_check
          %p290 = pneg %p84
        $region42: #{tpu_custom_call.1} parent=35 // pred_check_branch
          %292 = sbr.rel (%p290) target = $region44
        $region43: #{tpu_custom_call.1} parent=35 // pred_region
          %293 = dma.done [#allocation6], 128
        $region44: #{tpu_custom_call.1} parent=35 // pred_fallthru
          _
        %s294 = sand.u32 %s25, 1
        %s295 = scalar_lea.sflag [#allocation3], %s294
        %s296 = sand.u32 %s99, 1
        %s297 = smul.addr %s296, 8
        %s298 = scalar_lea.vmem [#allocation7], %s297
        // Predicated region
        $region45: #{tpu_custom_call.1} parent=35 // pred_check
          %p299 = pneg %p112
        $region46: #{tpu_custom_call.1} parent=35 // pred_check_branch
          %301 = sbr.rel (%p299) target = $region48
        $region47: #{tpu_custom_call.1} parent=35 // pred_region
          %302 = dma.done %s295, 128
        $region48: #{tpu_custom_call.1} parent=35 // pred_fallthru
          _
        %s303 = sand.u32 %s25, 1
        %s304 = scalar_lea.sflag [#allocation3], %s303
        %s305 = sand.u32 %s127, 1
        %s306 = smul.addr %s305, 8
        %s307 = scalar_lea.vmem [#allocation8], %s306
        // Predicated region
        $region49: #{tpu_custom_call.1} parent=35 // pred_check
          %p308 = pneg %p140
        $region50: #{tpu_custom_call.1} parent=35 // pred_check_branch
          %310 = sbr.rel (%p308) target = $region52
        $region51: #{tpu_custom_call.1} parent=35 // pred_region
          %311 = dma.done %s304, 128
        $region52: #{tpu_custom_call.1} parent=35 // pred_fallthru
          _
        %p312 = pneg %p58
        %p313 = pneg %p55
        %p314 = pneg %p84
        %p315 = pneg %p81
        %s316 = sand.u32 %s25, 1
        %s317 = scalar_lea.sflag [#allocation3], %s316
        %s318 = sand.u32 %s99, 1
        %s319 = smul.addr %s318, 8
        %s320 = scalar_lea.vmem [#allocation7], %s319
        %p321 = pneg %p112
        %p322 = pneg %p109
        %s323 = sand.u32 %s25, 1
        %s324 = scalar_lea.sflag [#allocation3], %s323
        %s325 = sand.u32 %s127, 1
        %s326 = smul.addr %s325, 8
        %s327 = scalar_lea.vmem [#allocation8], %s326
        %p328 = pneg %p140
        %p329 = pneg %p137
        %p330 = pneg %p168
        %p331 = pneg %p165
        %s332 = sand.u32 %s155, 1
        %s333 = scalar_lea.sflag [#allocation4], %s332
        %s334 = sand.u32 %s155, 1
        %s335 = smul.addr %s334, 8
        %s336 = scalar_lea.vmem [#allocation9], %s335
        %p337 = pneg %p196
        %p338 = pneg %p193
        %s339 = sand.u32 %s183, 1
        %s340 = scalar_lea.sflag [#allocation11], %s339
        %s341 = sand.u32 %s183, 1
        %s342 = smul.addr %s341, 8
        %s343 = scalar_lea.vmem [#allocation10], %s342
        %v344 = vld [vmem:[#allocation2] sm:$0xff]
        %v345 = vld [vmem:[#allocation5] sm:$0xff]
        %v346 = vld [vmem:[%s298] sm:$0xff]
        %v347 = vmul.f32 %v346, %v344
        %348 = vrot.lane.b32.xlu0 %v346, 8
        %v349 = vpop.permute.xlu0 %348
        %v350 = vmul.f32 %v349, %v345
        %v351 = vadd.f32 %v347, %v350
        %v352 = vmul.f32 %v346, %v345
        %353 = vrot.lane.b32.xlu0 %v352, 120
        %v354 = vpop.permute.xlu0 %353
        %v355 = vsub.f32 %v351, %v354
        %356 = vst [vmem:[%s336] sm:$0xff] %v355
        %v357 = vld [vmem:[%s307] sm:$0xff]
        %v358 = vmul.f32 %v357, %v344
        %359 = vrot.lane.b32.xlu0 %v357, 8
        %v360 = vpop.permute.xlu0 %359
        %v361 = vmul.f32 %v360, %v345
        %v362 = vadd.f32 %v358, %v361
        %v363 = vmul.f32 %v357, %v345
        %364 = vrot.lane.b32.xlu0 %v363, 120
        %v365 = vpop.permute.xlu0 %364
        %v366 = vsub.f32 %v362, %v365
        %367 = vst [vmem:[%s343] sm:$0xff] %v366
        %s368 = sand.u32 %s155, 1
        %s369 = scalar_lea.sflag [#allocation4], %s368
        %s370 = sand.u32 %s155, 1
        %s371 = smul.addr %s370, 8
        %s372 = scalar_lea.vmem [#allocation9], %s371
        %s373 = sand.u32 %s183, 1
        %s374 = scalar_lea.sflag [#allocation11], %s373
        %s375 = sand.u32 %s183, 1
        %s376 = smul.addr %s375, 8
        %s377 = scalar_lea.vmem [#allocation10], %s376
        // Predicated region
        $region53: #{tpu_custom_call.1} parent=35 // pred_check
          %p378 = pneg %p165
        $region54: #{tpu_custom_call.1} parent=35 // pred_check_branch
          %380 = sbr.rel (%p378) target = $region56
        $region55: #{tpu_custom_call.1} parent=35 // pred_region
          %s382 = ssub.s32 128, 128
          %383 = vsyncadd %s369, %s382
          %s384 = sadd.s32 %s29, %s30
          %s385 = smul.addr %s384, 128
          %s386 = scalar_lea.hbm %s4, %s385
          %s388 = sshll.u32 %s372, 4
          %s389 = int_to_ptr.vmem [resolvable:$true] %s388
          %391 = dma.vmem_to_hbm [thread:$0]  %s389, 128, %s386, %s369
        $region56: #{tpu_custom_call.1} parent=35 // pred_fallthru
          _
        // Predicated region
        $region57: #{tpu_custom_call.1} parent=35 // pred_check
          %p392 = pneg %p193
        $region58: #{tpu_custom_call.1} parent=35 // pred_check_branch
          %394 = sbr.rel (%p392) target = $region60
        $region59: #{tpu_custom_call.1} parent=35 // pred_region
          %s396 = ssub.s32 128, 128
          %397 = vsyncadd %s374, %s396
          %s398 = sadd.s32 %s29, %s30
          %s399 = smul.addr %s398, 128
          %s400 = scalar_lea.hbm %s5, %s399
          %s402 = sshll.u32 %s377, 4
          %s403 = int_to_ptr.vmem [resolvable:$true] %s402
          %405 = dma.vmem_to_hbm [thread:$0]  %s403, 128, %s400, %s374
        $region60: #{tpu_custom_call.1} parent=35 // pred_fallthru
          _
      $region36: #{tpu_custom_call.1} parent=5 // pred_fallthru
        _
      %p406 = scmp.le.s32.totalorder 2, %s20
      // Predicated region
      $region61: #{tpu_custom_call.1} parent=5 // pred_check
        %p407 = pneg %p406
      $region62: #{tpu_custom_call.1} parent=5 // pred_check_branch
        %409 = sbr.rel (%p407) target = $region64
      $region63: #{tpu_custom_call.1} parent=5 // pred_region
        %s410 = ssub.s32 %s20, 2
        // Predicated region
        $region65: #{tpu_custom_call.1} parent=63 // pred_check
          %p411 = pneg %p171
        $region66: #{tpu_custom_call.1} parent=63 // pred_check_branch
          %413 = sbr.rel (%p411) target = $region68
        $region67: #{tpu_custom_call.1} parent=63 // pred_region
          %s414 = sand.u32 %s156, 1
          %s415 = scalar_lea.sflag [#allocation4], %s414
          %s416 = sand.u32 %s156, 1
          %s417 = smul.addr %s416, 8
          %s418 = scalar_lea.vmem [#allocation9], %s417
          %419 = dma.done %s415, 128
        $region68: #{tpu_custom_call.1} parent=63 // pred_fallthru
          _
        // Predicated region
        $region69: #{tpu_custom_call.1} parent=63 // pred_check
          %p420 = pneg %p199
        $region70: #{tpu_custom_call.1} parent=63 // pred_check_branch
          %422 = sbr.rel (%p420) target = $region72
        $region71: #{tpu_custom_call.1} parent=63 // pred_region
          %s423 = sand.u32 %s184, 1
          %s424 = scalar_lea.sflag [#allocation11], %s423
          %s425 = sand.u32 %s184, 1
          %s426 = smul.addr %s425, 8
          %s427 = scalar_lea.vmem [#allocation10], %s426
          %428 = dma.done %s424, 128
        $region72: #{tpu_custom_call.1} parent=63 // pred_fallthru
          _
      $region64: #{tpu_custom_call.1} parent=5 // pred_fallthru
        _
    $region6: #{tpu_custom_call.1} parent=1 // loop_footer
      %s24 = sadd.s32 1, %s20
    $region7: #{tpu_custom_call.1} parent=1 // loop_footer_branch
      %19 = sbr.rel target = $region3
    $region8: #{tpu_custom_call.1} parent=1 // loop_exit
      _
    %429 = vsyncpa [#allocation3], 1
    %s430 = scalar_lea.sflag [#allocation3], 1
    %431 = vsyncpa %s430, 1
    %432 = vsyncpa [#allocation6], 1
    %433 = vsyncpa [#allocation4], 1
    %s434 = scalar_lea.sflag [#allocation4], 1
    %435 = vsyncpa %s434, 1
    %436 = vsyncpa [#allocation11], 1
    %s437 = scalar_lea.sflag [#allocation11], 1
    %438 = vsyncpa %s437, 1

</llo_original>
